<compile_context>
chip_gen: v7x
topology: tpu7x:2x2x1
jax: 0.10.0
libtpu: 0.0.40
codegen_flags: <defaults>
</compile_context>

<pallas_src>
import functools

import jax
import jax.numpy as jnp
from jax.experimental import pallas as pl
from jax.experimental.pallas import tpu as pltpu

_PREC = jax.lax.Precision.HIGHEST  # used only in the plain-JAX reference


# ---------------------------------------------------------------------------
# Shared in-kernel MLP (natural layout: h is (tile_b, hidden))
# ---------------------------------------------------------------------------
def _mlp_logits(refs, n_layers):
    """refs = x1, x2, w0d_t, w0m_t, b0, [w_t_i, b_i]*(n_layers-1), wc, bc(SMEM).

    Weights are pre-transposed to (in, out) in the wrapper, so every layer is
    h @ W_t with an f32 accumulator.  Returns (tile_b, 1) f32 logits.
    """
    x1 = refs[0][...]
    x2 = refs[1][...]
    w0d = refs[2][...]                              # (feat, H0)
    w0m = refs[3][...]
    b0 = refs[4][...]                               # (1, H0)
    # Form d/m directly in the streaming dtype (no full-size f32 copies).
    d = (x1 - x2).astype(w0d.dtype)
    m = ((x1 + x2) * 0.5).astype(w0m.dtype)
    h = (jnp.dot(d, w0d, preferred_element_type=jnp.float32)
         + jnp.dot(m, w0m, preferred_element_type=jnp.float32)
         + b0)
    h = jnp.maximum(h, 0.0)
    idx = 5
    for _ in range(n_layers - 1):
        w = refs[idx][...]                          # (H_prev, H)
        b = refs[idx + 1][...]                      # (1, H)
        idx += 2
        h = jnp.dot(h.astype(w.dtype), w, preferred_element_type=jnp.float32) + b
        h = jnp.maximum(h, 0.0)
    wc = refs[idx][...]                             # (1, H_last) f32
    bc = refs[idx + 1][0, 0]                        # SMEM scalar
    # out_features == 1: VPU multiply + XLU lane-reduce instead of N=1 MXU push.
    z = jnp.sum(h * wc, axis=-1, keepdims=True) + bc
    return z                                        # (tile_b, 1) f32


# ---------------------------------------------------------------------------
# Kernels
# ---------------------------------------------------------------------------
def _make_scores_kernel(n_layers):
    def kernel(*refs):
        out_ref = refs[-1]                          # (tile_b, 1)
        z = _mlp_logits(refs[:-1], n_layers)
        # sigmoid via EUP-approx reciprocal (documented: tiny shift near 0.5).
        out_ref[...] = pl.reciprocal(1.0 + jnp.exp(-z), approx=True)
    return kernel


def _make_loss_kernel(n_layers, similar_weight):
    def kernel(*refs):
        out_ref = refs[-1]                          # (tile_b, 1) per-example loss
        y2 = refs[-2][...]                          # (tile_b, 1)
        y1 = refs[-3][...]
        z = _mlp_logits(refs[:-3], n_layers)        # (tile_b, 1) f32
        p = 1.0 / (1.0 + jnp.exp(-z))               # exact sigmoid for threshold
        t = (y1 != y2).astype(jnp.float32)
        w = jnp.where(p < 0.5, jnp.float32(similar_weight), jnp.float32(1.0))
        # BCE(sigmoid(z), t) = softplus(z) - t*z   (numerically stable form)
        sp = jnp.maximum(z, 0.0) + jnp.log(1.0 + jnp.exp(-jnp.abs(z)))
        out_ref[...] = w * (sp - t * z)
    return kernel


# ---------------------------------------------------------------------------
# Wrapper helpers
# ---------------------------------------------------------------------------
def _round_up(x, m):
    return (x + m - 1) // m * m


def _vmem_capacity_bytes():
    """Per-core VMEM capacity (64 MiB v7x, 128 MiB v5e/v6e); conservative fallback."""
    try:
        info = pltpu.get_tpu_info()
        cap = getattr(info, "vmem_capacity_bytes", None)
        if cap:
            return int(cap)
    except Exception:
        pass
    return 64 * 1024 * 1024


def _choose_tile_and_limit(batch, feat, hidden_sizes, use_bf16):
    """VMEM-aware batch tile + explicit scoped-VMEM limit."""
    cap = _vmem_capacity_bytes()
    x_bytes = 2 if use_bf16 else 4
    w_bytes = 2 if use_bf16 else 4
    # Grid-invariant parameter footprint (assume double-buffered by the pipeline).
    w_elems = 0
    prev = 2 * feat
    for s in hidden_sizes:
        w_elems += prev * s + s
        prev = s
    w_elems += prev + 1                              # classifier
    resident = 2 * w_elems * w_bytes
    # Per-batch-row cost: streamed x tiles (2 inputs, double-buffered) plus
    # in-kernel temporaries (d, m, two live hidden activations at f32) + misc.
    hmax = max(hidden_sizes)
    per_row = (2 * 2 * feat * x_bytes
               + 2 * feat * 4
               + 2 * hmax * 4
               + 32)
    budget = int(cap * 0.6)                          # headroom for compiler scratch
    avail = budget - resident - (2 << 20)
    tile = avail // per_row if avail > 0 else 8
    tile = max(8, min(1024, int(tile)))
    tile = (tile // 128) * 128 if tile >= 128 else (tile // 8) * 8
    tile = min(tile, _round_up(batch, 8))
    vmem_limit = int(cap * 0.9)
    return tile, vmem_limit


def _pad_rows(a, b_pad):
    b = a.shape[0]
    if b_pad > b:
        pads = ((0, b_pad - b),) + ((0, 0),) * (a.ndim - 1)
        a = jnp.pad(a, pads)
    return a


def _full2d(shape):
    return pl.BlockSpec(shape, lambda i: (0, 0))


def _mlp_args_and_specs(params, x1, x2, tile_b, b_pad, use_bf16):
    ws, bs, wc, bc = params
    batch, feat = x1.shape
    xdt = jnp.bfloat16 if use_bf16 else jnp.float32
    wdt = jnp.bfloat16 if use_bf16 else jnp.float32

    x_spec = pl.BlockSpec((tile_b, feat), lambda i: (i, 0))
    w0 = ws[0]
    h0 = w0.shape[0]
    args = [_pad_rows(x1.astype(xdt), b_pad), _pad_rows(x2.astype(xdt), b_pad),
            jnp.transpose(w0[:, :feat]).astype(wdt),      # (feat, H0)
            jnp.transpose(w0[:, feat:]).astype(wdt),      # (feat, H0)
            bs[0].astype(jnp.float32).reshape(1, -1)]
    specs = [x_spec, x_spec,
             _full2d((feat, h0)), _full2d((feat, h0)), _full2d((1, h0))]
    for li in range(1, len(ws)):
        w = ws[li]
        args += [jnp.transpose(w).astype(wdt),            # (H_prev, H)
                 bs[li].astype(jnp.float32).reshape(1, -1)]
        specs += [_full2d((w.shape[1], w.shape[0])), _full2d((1, w.shape[0]))]
    args += [wc.astype(jnp.float32).reshape(1, -1),
             bc.astype(jnp.float32).reshape(1, 1)]
    specs += [_full2d((1, wc.shape[1])),
              pl.BlockSpec((1, 1), lambda i: (0, 0),
                           memory_space=pltpu.MemorySpace.SMEM)]
    return args, specs


# ---------------------------------------------------------------------------
# Public wrappers
# ---------------------------------------------------------------------------
@functools.partial(jax.jit, static_argnames=("use_bf16",))
def contrast_scores(params, x1, x2, *, use_bf16=False):
    batch, feat = x1.shape
    ws = params[0]
    n_layers = len(ws)
    hidden = [w.shape[0] for w in ws]
    tile_b, vmem_limit = _choose_tile_and_limit(batch, feat, hidden, use_bf16)
    b_pad = _round_up(batch, tile_b)
    args, specs = _mlp_args_and_specs(params, x1, x2, tile_b, b_pad, use_bf16)
    out = pl.pallas_call(
        _make_scores_kernel(n_layers),
        grid=(b_pad // tile_b,),
        in_specs=specs,
        out_specs=pl.BlockSpec((tile_b, 1), lambda i: (i, 0)),
        out_shape=jax.ShapeDtypeStruct((b_pad, 1), jnp.float32),
        compiler_params=pltpu.CompilerParams(
            dimension_semantics=("parallel",),
            vmem_limit_bytes=vmem_limit),
    )(*args)
    return out[:batch, 0]


@functools.partial(jax.jit, static_argnames=("similar_weight", "use_bf16"))
def contrast_loss(params, x1, x2, y1, y2, *, similar_weight=1.0, use_bf16=False):
    batch, feat = x1.shape
    ws = params[0]
    n_layers = len(ws)
    hidden = [w.shape[0] for w in ws]
    tile_b, vmem_limit = _choose_tile_and_limit(batch, feat, hidden, use_bf16)
    b_pad = _round_up(batch, tile_b)
    args, specs = _mlp_args_and_specs(params, x1, x2, tile_b, b_pad, use_bf16)

    def prep_y(y):
        return _pad_rows(y.astype(jnp.float32).reshape(batch, 1), b_pad)

    y_spec = pl.BlockSpec((tile_b, 1), lambda i: (i, 0))
    args += [prep_y(y1), prep_y(y2)]
    specs += [y_spec, y_spec]

    # Fully parallel grid (no cross-iteration accumulator): each tile emits
    # per-example weighted BCE; the tiny reduction happens here in the wrapper.
    per_ex = pl.pallas_call(
        _make_loss_kernel(n_layers, float(similar_weight)),
        grid=(b_pad // tile_b,),
        in_specs=specs,
        out_specs=pl.BlockSpec((tile_b, 1), lambda i: (i, 0)),
        out_shape=jax.ShapeDtypeStruct((b_pad, 1), jnp.float32),
        compiler_params=pltpu.CompilerParams(
            dimension_semantics=("parallel",),
            vmem_limit_bytes=vmem_limit),
    )(*args)
    return jnp.sum(per_ex[:batch, 0]) / batch


def contrast_model_forward(params, x1, x2, y1=None, y2=None, *,
                           classify=True, similar_weight=1.0, use_bf16=False):
    """Mirrors ContrastModel.forward (classify / similar_weight are static config)."""
    if y1 is not None and y2 is not None and classify:
        return contrast_loss(params, x1, x2, y1, y2,
                             similar_weight=similar_weight, use_bf16=use_bf16)
    return contrast_scores(params, x1, x2, use_bf16=use_bf16)


# ---------------------------------------------------------------------------
# Plain-JAX reference (for sanity checks)
# ---------------------------------------------------------------------------
def _ref_scores(params, x1, x2):
    ws, bs, wc, bc = params
    x = jnp.concatenate([x1 - x2, (x1 + x2) * 0.5], axis=-1)
    for w, b in zip(ws, bs):
        x = jax.nn.relu(jnp.dot(x, w.T, precision=_PREC) + b)
    z = jnp.dot(x, wc.T, precision=_PREC) + bc
    return jax.nn.sigmoid(z)[:, 0]


def _ref_loss(params, x1, x2, y1, y2, similar_weight):
    p = _ref_scores(params, x1, x2)
    t = (y1 != y2).astype(jnp.float32)
    w = jnp.where(p < 0.5, similar_weight, 1.0)
    l = -(t * jnp.log(p) + (1.0 - t) * jnp.log(1.0 - p))
    return jnp.mean(w * l)


# ---------------------------------------------------------------------------
# Demo / test
# ---------------------------------------------------------------------------
if __name__ == "__main__":
    key = jax.random.PRNGKey(0)
    k_layers, k_cls, k_x1, k_x2, k_y1, k_y2 = jax.random.split(key, 6)

    batch, input_size = 8, 16
    layer_sizes = [32, 16]
    similar_weight = 2.0

    def init_linear(k, fan_in, fan_out):
        kw, kb = jax.random.split(k)
        bound = 1.0 / (fan_in ** 0.5)
        w = jax.random.uniform(kw, (fan_out, fan_in), minval=-bound,
                               maxval=bound, dtype=jnp.float32)
        b = jax.random.uniform(kb, (fan_out,), minval=-bound,
                               maxval=bound, dtype=jnp.float32)
        return w, b

    ws, bs = [], []
    prev = input_size * 2
    for size, lk in zip(layer_sizes, jax.random.split(k_layers, len(layer_sizes))):
        w, b = init_linear(lk, prev, size)
        ws.append(w)
        bs.append(b)
        prev = size
    wc, bc = init_linear(k_cls, prev, 1)
    params = (tuple(ws), tuple(bs), wc, bc)

    x1 = jax.random.normal(k_x1, (batch, input_size), dtype=jnp.float32)
    x2 = jax.random.normal(k_x2, (batch, input_size), dtype=jnp.float32)
    y1 = jax.random.randint(k_y1, (batch,), 0, 3).astype(jnp.float32)
    y2 = jax.random.randint(k_y2, (batch,), 0, 3).astype(jnp.float32)

    # Inference path (y is None) -> per-row sigmoid scores.
    scores = jax.block_until_ready(contrast_model_forward(params, x1, x2))
    ref_sc = _ref_scores(params, x1, x2)
    assert scores.shape == (batch,)
    assert jnp.allclose(scores, ref_sc, atol=5e-3), (scores, ref_sc)

    # Training path -> weighted binary cross-entropy (mean reduction).
    loss = jax.block_until_ready(contrast_model_forward(
        params, x1, x2, y1, y2, classify=True, similar_weight=similar_weight))
    ref_l = _ref_loss(params, x1, x2, y1, y2, similar_weight)
    assert jnp.allclose(loss, ref_l, atol=2e-3, rtol=2e-3), (loss, ref_l)

    # bf16 streaming path (production option: halves HBM input traffic).
    scores_bf16 = jax.block_until_ready(
        contrast_model_forward(params, x1, x2, use_bf16=True))
    assert jnp.allclose(scores_bf16, ref_sc, atol=5e-2)

    loss_bf16 = jax.block_until_ready(contrast_model_forward(
        params, x1, x2, y1, y2, classify=True, similar_weight=similar_weight,
        use_bf16=True))
    assert jnp.allclose(loss_bf16, ref_l, atol=5e-2, rtol=5e-2)

    print("KERNEL_OK")
</pallas_src>

<mosaic_0001>
module attributes {stable_mosaic.version = 11 : i64} {
  func.func @kernel(%arg0: i32, %arg1: memref<8x16xf32, #tpu.memory_space<vmem>>, %arg2: memref<8x16xf32, #tpu.memory_space<vmem>>, %arg3: memref<16x32xf32, #tpu.memory_space<vmem>>, %arg4: memref<16x32xf32, #tpu.memory_space<vmem>>, %arg5: memref<1x32xf32, #tpu.memory_space<vmem>>, %arg6: memref<32x16xf32, #tpu.memory_space<vmem>>, %arg7: memref<1x16xf32, #tpu.memory_space<vmem>>, %arg8: memref<1x16xf32, #tpu.memory_space<vmem>>, %arg9: memref<1x1xf32, #tpu.memory_space<smem>>, %arg10: memref<8x1xf32, #tpu.memory_space<vmem>>) attributes {dimension_semantics = [#tpu.dimension_semantics<parallel>], iteration_bounds = array<i64: 1>, scalar_prefetch = 0 : i64, scratch_operands = 0 : i64, tpu.core_type = #tpu.core_type<tc>, window_params = [{transform_indices = @transform_0, window_bounds = array<i64: 8, 16>}, {transform_indices = @transform_1, window_bounds = array<i64: 8, 16>}, {pipeline_mode = #tpu.pipeline_mode<synchronous>, transform_indices = @transform_2, window_bounds = array<i64: 16, 32>}, {pipeline_mode = #tpu.pipeline_mode<synchronous>, transform_indices = @transform_3, window_bounds = array<i64: 16, 32>}, {pipeline_mode = #tpu.pipeline_mode<synchronous>, transform_indices = @transform_4, window_bounds = array<i64: 1, 32>}, {pipeline_mode = #tpu.pipeline_mode<synchronous>, transform_indices = @transform_5, window_bounds = array<i64: 32, 16>}, {pipeline_mode = #tpu.pipeline_mode<synchronous>, transform_indices = @transform_6, window_bounds = array<i64: 1, 16>}, {pipeline_mode = #tpu.pipeline_mode<synchronous>, transform_indices = @transform_7, window_bounds = array<i64: 1, 16>}, {transform_indices = @transform_8, window_bounds = array<i64: 1, 1>}, {transform_indices = @transform_9, window_bounds = array<i64: 8, 1>}]} {
    %c0 = arith.constant 0 : index
    %c0_0 = arith.constant 0 : index
    %0 = vector.load %arg1[%c0, %c0_0] : memref<8x16xf32, #tpu.memory_space<vmem>>, vector<8x16xf32>
    %c0_1 = arith.constant 0 : index
    %c0_2 = arith.constant 0 : index
    %1 = vector.load %arg2[%c0_1, %c0_2] : memref<8x16xf32, #tpu.memory_space<vmem>>, vector<8x16xf32>
    %c0_3 = arith.constant 0 : index
    %c0_4 = arith.constant 0 : index
    %2 = vector.load %arg3[%c0_3, %c0_4] : memref<16x32xf32, #tpu.memory_space<vmem>>, vector<16x32xf32>
    %c0_5 = arith.constant 0 : index
    %c0_6 = arith.constant 0 : index
    %3 = vector.load %arg4[%c0_5, %c0_6] : memref<16x32xf32, #tpu.memory_space<vmem>>, vector<16x32xf32>
    %c0_7 = arith.constant 0 : index
    %c0_8 = arith.constant 0 : index
    %4 = vector.load %arg5[%c0_7, %c0_8] : memref<1x32xf32, #tpu.memory_space<vmem>>, vector<1x32xf32>
    %5 = arith.subf %0, %1 : vector<8x16xf32>
    %6 = arith.addf %0, %1 : vector<8x16xf32>
    %cst = arith.constant 5.000000e-01 : f32
    %7 = vector.broadcast %cst : f32 to vector<8x16xf32>
    %8 = arith.mulf %6, %7 : vector<8x16xf32>
    %cst_9 = arith.constant dense<0.000000e+00> : vector<8x32xf32>
    %9 = tpu.matmul %5, %2, %cst_9 {dimension_numbers = #tpu.dot_dimension_numbers<[1], [0], [0], [1], [0, 0, 1, 1], [], []>} : vector<8x16xf32>, vector<16x32xf32>, vector<8x32xf32> -> vector<8x32xf32>
    %cst_10 = arith.constant dense<0.000000e+00> : vector<8x32xf32>
    %10 = tpu.matmul %8, %3, %cst_10 {dimension_numbers = #tpu.dot_dimension_numbers<[1], [0], [0], [1], [0, 0, 1, 1], [], []>} : vector<8x16xf32>, vector<16x32xf32>, vector<8x32xf32> -> vector<8x32xf32>
    %11 = arith.addf %9, %10 : vector<8x32xf32>
    %12 = vector.broadcast %4 : vector<1x32xf32> to vector<8x32xf32>
    %13 = arith.addf %11, %12 : vector<8x32xf32>
    %cst_11 = arith.constant 0.000000e+00 : f32
    %14 = vector.broadcast %cst_11 : f32 to vector<8x32xf32>
    %15 = arith.maximumf %13, %14 : vector<8x32xf32>
    %c0_12 = arith.constant 0 : index
    %c0_13 = arith.constant 0 : index
    %16 = vector.load %arg6[%c0_12, %c0_13] : memref<32x16xf32, #tpu.memory_space<vmem>>, vector<32x16xf32>
    %c0_14 = arith.constant 0 : index
    %c0_15 = arith.constant 0 : index
    %17 = vector.load %arg7[%c0_14, %c0_15] : memref<1x16xf32, #tpu.memory_space<vmem>>, vector<1x16xf32>
    %cst_16 = arith.constant dense<0.000000e+00> : vector<8x16xf32>
    %18 = tpu.matmul %15, %16, %cst_16 {dimension_numbers = #tpu.dot_dimension_numbers<[1], [0], [0], [1], [0, 0, 1, 1], [], []>} : vector<8x32xf32>, vector<32x16xf32>, vector<8x16xf32> -> vector<8x16xf32>
    %19 = vector.broadcast %17 : vector<1x16xf32> to vector<8x16xf32>
    %20 = arith.addf %18, %19 : vector<8x16xf32>
    %cst_17 = arith.constant 0.000000e+00 : f32
    %21 = vector.broadcast %cst_17 : f32 to vector<8x16xf32>
    %22 = arith.maximumf %20, %21 : vector<8x16xf32>
    %c0_18 = arith.constant 0 : index
    %c0_19 = arith.constant 0 : index
    %23 = vector.load %arg8[%c0_18, %c0_19] : memref<1x16xf32, #tpu.memory_space<vmem>>, vector<1x16xf32>
    %c0_20 = arith.constant 0 : index
    %c0_21 = arith.constant 0 : index
    %24 = memref.load %arg9[%c0_20, %c0_21] : memref<1x1xf32, #tpu.memory_space<smem>>
    %25 = vector.broadcast %23 : vector<1x16xf32> to vector<8x16xf32>
    %26 = arith.mulf %22, %25 : vector<8x16xf32>
    %cst_22 = arith.constant dense<0.000000e+00> : vector<8xf32>
    %27 = vector.multi_reduction <add>, %26, %cst_22 [1] : vector<8x16xf32> to vector<8xf32>
    %28 = vector.shape_cast %27 : vector<8xf32> to vector<8x1xf32>
    %29 = vector.broadcast %24 : f32 to vector<8x1xf32>
    %30 = arith.addf %28, %29 : vector<8x1xf32>
    %cst_23 = arith.constant 0.000000e+00 : f32
    %31 = vector.broadcast %cst_23 : f32 to vector<8x1xf32>
    %32 = arith.subf %31, %30 : vector<8x1xf32>
    %33 = math.exp %32 : vector<8x1xf32>
    %cst_24 = arith.constant 1.000000e+00 : f32
    %34 = vector.broadcast %cst_24 : f32 to vector<8x1xf32>
    %35 = arith.addf %34, %33 : vector<8x1xf32>
    %36 = tpu.reciprocal %35 {approx = true} : vector<8x1xf32> -> vector<8x1xf32>
    %c0_25 = arith.constant 0 : index
    %c0_26 = arith.constant 0 : index
    %37 = vector.load %arg10[%c0_25, %c0_26] : memref<8x1xf32, #tpu.memory_space<vmem>>, vector<8x1xf32>
    tpu.vector_store %arg10[%c0_25, %c0_26], %36 {strides = array<i32>} : memref<8x1xf32, #tpu.memory_space<vmem>>, vector<8x1xf32>,
    return
  }
  func.func @transform_0(%arg0: i32) -> (i32, i32) {
    %c0_i32 = arith.constant 0 : i32
    %c0_i32_0 = arith.constant 0 : i32
    return %arg0, %c0_i32 : i32, i32
  }
  func.func @transform_1(%arg0: i32) -> (i32, i32) {
    %c0_i32 = arith.constant 0 : i32
    %c0_i32_0 = arith.constant 0 : i32
    return %arg0, %c0_i32 : i32, i32
  }
  func.func @transform_2(%arg0: i32) -> (i32, i32) {
    %c0_i32 = arith.constant 0 : i32
    %c0_i32_0 = arith.constant 0 : i32
    %c0_i32_1 = arith.constant 0 : i32
    return %c0_i32, %c0_i32_0 : i32, i32
  }
  func.func @transform_3(%arg0: i32) -> (i32, i32) {
    %c0_i32 = arith.constant 0 : i32
    %c0_i32_0 = arith.constant 0 : i32
    %c0_i32_1 = arith.constant 0 : i32
    return %c0_i32, %c0_i32_0 : i32, i32
  }
  func.func @transform_4(%arg0: i32) -> (i32, i32) {
    %c0_i32 = arith.constant 0 : i32
    %c0_i32_0 = arith.constant 0 : i32
    %c0_i32_1 = arith.constant 0 : i32
    return %c0_i32, %c0_i32_0 : i32, i32
  }
  func.func @transform_5(%arg0: i32) -> (i32, i32) {
    %c0_i32 = arith.constant 0 : i32
    %c0_i32_0 = arith.constant 0 : i32
    %c0_i32_1 = arith.constant 0 : i32
    return %c0_i32, %c0_i32_0 : i32, i32
  }
  func.func @transform_6(%arg0: i32) -> (i32, i32) {
    %c0_i32 = arith.constant 0 : i32
    %c0_i32_0 = arith.constant 0 : i32
    %c0_i32_1 = arith.constant 0 : i32
    return %c0_i32, %c0_i32_0 : i32, i32
  }
  func.func @transform_7(%arg0: i32) -> (i32, i32) {
    %c0_i32 = arith.constant 0 : i32
    %c0_i32_0 = arith.constant 0 : i32
    %c0_i32_1 = arith.constant 0 : i32
    return %c0_i32, %c0_i32_0 : i32, i32
  }
  func.func @transform_8(%arg0: i32) -> (i32, i32) {
    %c0_i32 = arith.constant 0 : i32
    %c0_i32_0 = arith.constant 0 : i32
    %c0_i32_1 = arith.constant 0 : i32
    return %c0_i32, %c0_i32_0 : i32, i32
  }
  func.func @transform_9(%arg0: i32) -> (i32, i32) {
    %c0_i32 = arith.constant 0 : i32
    %c0_i32_0 = arith.constant 0 : i32
    return %arg0, %c0_i32 : i32, i32
  }
}

</mosaic_0001>

<llo_original>
// kernel: contrast_scores.1
$region0: #{contrast_scores.1}
  #allocation0 [shape = 'u32[]', space=smem, size = 0x4, offset = 0x4, fixed_abs, tag = 'smem constant byte address 0x4 - core index']
  #allocation1 [shape = 'u32[144,128]{1,0:T(1,128)}', space=vmem, size = 0x12000, scoped, tag = 'internal scratch']
  #allocation2 [shape = 'f32[1,1]{1,0:T(1,128)S(6)}', space=smem, size = 0x200, scoped, tag = 'scoped memory for contrast_scores.1']
  %s0 = inlined_call_operand.vmem [shape: f32[8,16], index: 0, kind: input, shape index: {}]
  %s1 = inlined_call_operand.vmem [shape: f32[8,16], index: 1, kind: input, shape index: {}]
  %s2 = inlined_call_operand.vmem [shape: f32[16,32], index: 2, kind: input, shape index: {}]
  %s3 = inlined_call_operand.vmem [shape: f32[16,32], index: 3, kind: input, shape index: {}]
  %s4 = inlined_call_operand.vmem [shape: f32[1,32], index: 4, kind: input, shape index: {}]
  %s5 = inlined_call_operand.vmem [shape: f32[32,16], index: 5, kind: input, shape index: {}]
  %s6 = inlined_call_operand.vmem [shape: f32[1,16], index: 6, kind: input, shape index: {}]
  %s7 = inlined_call_operand.vmem [shape: f32[1,16], index: 7, kind: input, shape index: {}]
  %s8 = inlined_call_operand.<no memory space> [shape: f32[1,1], index: 8, kind: input, shape index: {}]
  %s9 = inlined_call_operand.vmem [shape: f32[8,1], index: 9, kind: output, shape index: {}]
  %s10 = sld [smem:[#allocation0]]
  $region46: #{contrast_scores.1} parent=0
    _
  %s12 = ssub.s32 1, %s10
  %s13 = scalar_select 0, %s12, %s10
  %14 = sst [smem:[#allocation2]] %s8
  // Predicated region
  $region2: #{contrast_scores.1} parent=0 // pred_check
    _
  $region3: #{contrast_scores.1} parent=0 // pred_check_branch
    %16 = sbr.rel (0) target = $region5
  $region4: #{contrast_scores.1} parent=0 // pred_region
    _
  $region5: #{contrast_scores.1} parent=0 // pred_fallthru
    _
  // Predicated region
  $region6: #{contrast_scores.1} parent=0 // pred_check
    _
  $region7: #{contrast_scores.1} parent=0 // pred_check_branch
    %18 = sbr.rel (0) target = $region9
  $region8: #{contrast_scores.1} parent=0 // pred_region
    _
  $region9: #{contrast_scores.1} parent=0 // pred_fallthru
    _
  // Predicated region
  $region10: #{contrast_scores.1} parent=0 // pred_check
    _
  $region11: #{contrast_scores.1} parent=0 // pred_check_branch
    %20 = sbr.rel (0) target = $region13
  $region12: #{contrast_scores.1} parent=0 // pred_region
    _
  $region13: #{contrast_scores.1} parent=0 // pred_fallthru
    _
  // Predicated region
  $region14: #{contrast_scores.1} parent=0 // pred_check
    _
  $region15: #{contrast_scores.1} parent=0 // pred_check_branch
    %22 = sbr.rel (0) target = $region17
  $region16: #{contrast_scores.1} parent=0 // pred_region
    _
  $region17: #{contrast_scores.1} parent=0 // pred_fallthru
    _
  // Predicated region
  $region18: #{contrast_scores.1} parent=0 // pred_check
    _
  $region19: #{contrast_scores.1} parent=0 // pred_check_branch
    %24 = sbr.rel (0) target = $region21
  $region20: #{contrast_scores.1} parent=0 // pred_region
    _
  $region21: #{contrast_scores.1} parent=0 // pred_fallthru
    _
  // Predicated region
  $region22: #{contrast_scores.1} parent=0 // pred_check
    _
  $region23: #{contrast_scores.1} parent=0 // pred_check_branch
    %26 = sbr.rel (0) target = $region25
  $region24: #{contrast_scores.1} parent=0 // pred_region
    _
  $region25: #{contrast_scores.1} parent=0 // pred_fallthru
    _
  // Predicated region
  $region26: #{contrast_scores.1} parent=0 // pred_check
    _
  $region27: #{contrast_scores.1} parent=0 // pred_check_branch
    %28 = sbr.rel (0) target = $region29
  $region28: #{contrast_scores.1} parent=0 // pred_region
    _
  $region29: #{contrast_scores.1} parent=0 // pred_fallthru
    _
  // Predicated region
  $region30: #{contrast_scores.1} parent=0 // pred_check
    _
  $region31: #{contrast_scores.1} parent=0 // pred_check_branch
    %30 = sbr.rel (0) target = $region33
  $region32: #{contrast_scores.1} parent=0 // pred_region
    _
  $region33: #{contrast_scores.1} parent=0 // pred_fallthru
    _
  // Predicated region
  $region34: #{contrast_scores.1} parent=0 // pred_check
    _
  $region35: #{contrast_scores.1} parent=0 // pred_check_branch
    %32 = sbr.rel (0) target = $region37
  $region36: #{contrast_scores.1} parent=0 // pred_region
    _
  $region37: #{contrast_scores.1} parent=0 // pred_fallthru
    _
  %v33 = vld [vmem:[%s0] sm:$0xff]
  %v34 = vld [vmem:[%s1] sm:$0xff]
  %v35 = vld [vmem:[%s2] sm:$0xff]
  %v36 = vld [vmem:[%s2 + $0x8] sm:$0xff]
  %v37 = vld [vmem:[%s3] sm:$0xff]
  %v38 = vld [vmem:[%s3 + $0x8] sm:$0xff]
  %v39 = vld [vmem:[%s4] sm:$0x1]
  %v40 = vsub.f32 %v33, %v34
  %v41 = vadd.f32 %v33, %v34
  %v42 = vmul.f32 %v41, 0.5
  %vm43 = vcmask 130048
  %v45 = vsel %vm43, %v42, 0
  %47 = vmatprep.subr.mxu0 0.0
  %48 = vmatpush1.msra.mxu0 %v37
  %49 = vmatprep.subr.mxu0 0.0
  %50 = vmatpush1.msra.mxu0 %v38
  %51 = vmatprep.subr.mxu0 0.0
  %52 = vmatpush1.msra.mxu0 0.0
  %53 = vmatprep.subr.mxu0 0.0
  %54 = vmatpush1.msra.mxu0 0.0
  %55 = vmatprep.subr.mxu0 0.0
  %56 = vmatpush1.msra.mxu0 0.0
  %57 = vmatprep.subr.mxu0 0.0
  %58 = vmatpush1.msra.mxu0 0.0
  %59 = vmatprep.subr.mxu0 0.0
  %60 = vmatpush1.msra.mxu0 0.0
  %61 = vmatprep.subr.mxu0 0.0
  %62 = vmatpush1.msra.mxu0 0.0
  %63 = vmatprep.subr.mxu0 0.0
  %64 = vmatpush1.msra.mxu0 0.0
  %65 = vmatprep.subr.mxu0 0.0
  %66 = vmatpush1.msra.mxu0 0.0
  %67 = vmatprep.subr.mxu0 0.0
  %68 = vmatpush1.msra.mxu0 0.0
  %69 = vmatprep.subr.mxu0 0.0
  %70 = vmatpush1.msra.mxu0 0.0
  %71 = vmatprep.subr.mxu0 0.0
  %72 = vmatpush1.msra.mxu0 0.0
  %73 = vmatprep.subr.mxu0 0.0
  %74 = vmatpush1.msra.mxu0 0.0
  %75 = vmatprep.subr.mxu0 0.0
  %76 = vmatpush1.msra.mxu0 0.0
  %77 = vmatprep.subr.mxu0 0.0
  %78 = vmatpush1.msra.mxu0 0.0
  %79 = vmatprep.subr.mxu0 0.0
  %80 = vmatpush1.msra.mxu0 0.0
  %81 = vmatprep.subr.mxu0 0.0
  %82 = vmatpush1.msra.mxu0 0.0
  %83 = vmatprep.subr.mxu0 0.0
  %84 = vmatpush1.msra.mxu0 0.0
  %85 = vmatprep.subr.mxu0 0.0
  %86 = vmatpush1.msra.mxu0 0.0
  %87 = vmatprep.subr.mxu0 0.0
  %88 = vmatpush1.msra.mxu0 0.0
  %89 = vmatprep.subr.mxu0 0.0
  %90 = vmatpush1.msra.mxu0 0.0
  %91 = vmatprep.subr.mxu0 0.0
  %92 = vmatpush1.msra.mxu0 0.0
  %93 = vmatprep.subr.mxu0 0.0
  %94 = vmatpush1.msra.mxu0 0.0
  %95 = vmatprep.subr.mxu0 0.0
  %96 = vmatpush1.msra.mxu0 0.0
  %97 = vmatprep.subr.mxu0 0.0
  %98 = vmatpush1.msra.mxu0 0.0
  %99 = vmatprep.subr.mxu0 0.0
  %100 = vmatpush1.msra.mxu0 0.0
  %101 = vmatprep.subr.mxu0 0.0
  %102 = vmatpush1.msra.mxu0 0.0
  %103 = vmatprep.subr.mxu0 0.0
  %104 = vmatpush1.msra.mxu0 0.0
  %105 = vmatprep.subr.mxu0 0.0
  %106 = vmatpush1.msra.mxu0 0.0
  %107 = vmatprep.subr.mxu0 0.0
  %108 = vmatpush1.msra.mxu0 0.0
  %109 = vmatprep.subr.mxu0 0.0
  %110 = vmatpush1.msra.mxu0 0.0
  %111 = vmatprep.mubr.f32.mxu0 0.0
  %112 = vmatmul.mubr.f32.gmra.mrb[0].mxu0 %v45
  %v113 = vpop.f32.mrb[0].mxu0
  %v114 = vadd.f32 0.0, %v113
  %v115 = vpop.f32.mrb[0].mxu0
  %116 = vdwg.mxu0
  %v118 = vsel %vm43, %v40, 0
  %120 = vmatprep.subr.mxu0 0.0
  %121 = vmatpush1.msra.mxu0 %v35
  %122 = vmatprep.subr.mxu0 0.0
  %123 = vmatpush1.msra.mxu0 %v36
  %124 = vmatprep.subr.mxu0 0.0
  %125 = vmatpush1.msra.mxu0 0.0
  %126 = vmatprep.subr.mxu0 0.0
  %127 = vmatpush1.msra.mxu0 0.0
  %128 = vmatprep.subr.mxu0 0.0
  %129 = vmatpush1.msra.mxu0 0.0
  %130 = vmatprep.subr.mxu0 0.0
  %131 = vmatpush1.msra.mxu0 0.0
  %132 = vmatprep.subr.mxu0 0.0
  %133 = vmatpush1.msra.mxu0 0.0
  %134 = vmatprep.subr.mxu0 0.0
  %135 = vmatpush1.msra.mxu0 0.0
  %136 = vmatprep.subr.mxu0 0.0
  %137 = vmatpush1.msra.mxu0 0.0
  %138 = vmatprep.subr.mxu0 0.0
  %139 = vmatpush1.msra.mxu0 0.0
  %140 = vmatprep.subr.mxu0 0.0
  %141 = vmatpush1.msra.mxu0 0.0
  %142 = vmatprep.subr.mxu0 0.0
  %143 = vmatpush1.msra.mxu0 0.0
  %144 = vmatprep.subr.mxu0 0.0
  %145 = vmatpush1.msra.mxu0 0.0
  %146 = vmatprep.subr.mxu0 0.0
  %147 = vmatpush1.msra.mxu0 0.0
  %148 = vmatprep.subr.mxu0 0.0
  %149 = vmatpush1.msra.mxu0 0.0
  %150 = vmatprep.subr.mxu0 0.0
  %151 = vmatpush1.msra.mxu0 0.0
  %152 = vmatprep.subr.mxu0 0.0
  %153 = vmatpush1.msra.mxu0 0.0
  %154 = vmatprep.subr.mxu0 0.0
  %155 = vmatpush1.msra.mxu0 0.0
  %156 = vmatprep.subr.mxu0 0.0
  %157 = vmatpush1.msra.mxu0 0.0
  %158 = vmatprep.subr.mxu0 0.0
  %159 = vmatpush1.msra.mxu0 0.0
  %160 = vmatprep.subr.mxu0 0.0
  %161 = vmatpush1.msra.mxu0 0.0
  %162 = vmatprep.subr.mxu0 0.0
  %163 = vmatpush1.msra.mxu0 0.0
  %164 = vmatprep.subr.mxu0 0.0
  %165 = vmatpush1.msra.mxu0 0.0
  %166 = vmatprep.subr.mxu0 0.0
  %167 = vmatpush1.msra.mxu0 0.0
  %168 = vmatprep.subr.mxu0 0.0
  %169 = vmatpush1.msra.mxu0 0.0
  %170 = vmatprep.subr.mxu0 0.0
  %171 = vmatpush1.msra.mxu0 0.0
  %172 = vmatprep.subr.mxu0 0.0
  %173 = vmatpush1.msra.mxu0 0.0
  %174 = vmatprep.subr.mxu0 0.0
  %175 = vmatpush1.msra.mxu0 0.0
  %176 = vmatprep.subr.mxu0 0.0
  %177 = vmatpush1.msra.mxu0 0.0
  %178 = vmatprep.subr.mxu0 0.0
  %179 = vmatpush1.msra.mxu0 0.0
  %180 = vmatprep.subr.mxu0 0.0
  %181 = vmatpush1.msra.mxu0 0.0
  %182 = vmatprep.subr.mxu0 0.0
  %183 = vmatpush1.msra.mxu0 0.0
  %184 = vmatprep.mubr.f32.mxu0 0.0
  %185 = vmatmul.mubr.f32.gmra.mrb[0].mxu0 %v118
  %v186 = vpop.f32.mrb[0].mxu0
  %v187 = vadd.f32 %v114, %v186
  %v188 = vpop.f32.mrb[0].mxu0
  %189 = vdwg.mxu0
  %v191 = vlaneseq
  %v192 = vshrl.u32 %v191, 7
  %v193 = vsub.s32 0, %v192
  %v194 = vrot.slane %v39, %v193
  %v196 = vadd.f32 %v187, %v194
  %v197 = vmax.f32 %v196, 0.0
  %v198 = vld [vmem:[%s5] sm:$0xff]
  %v199 = vld [vmem:[%s5 + $0x8] sm:$0xff]
  %v200 = vld [vmem:[%s5 + $0x10] sm:$0xff]
  %v201 = vld [vmem:[%s5 + $0x18] sm:$0xff]
  %v202 = vld [vmem:[%s6] sm:$0x1]
  %v204 = vlaneseq
  %v205 = vshrl.u32 %v204, 7
  %v206 = vsub.s32 0, %v205
  %v207 = vrot.slane %v202, %v206
  %vm209 = vcmask 261120
  %v211 = vsel %vm209, %v197, 0
  %213 = vmatprep.subr.mxu0 0.0
  %214 = vmatpush1.msra.mxu0 %v198
  %215 = vmatprep.subr.mxu0 0.0
  %216 = vmatpush1.msra.mxu0 %v199
  %217 = vmatprep.subr.mxu0 0.0
  %218 = vmatpush1.msra.mxu0 %v200
  %219 = vmatprep.subr.mxu0 0.0
  %220 = vmatpush1.msra.mxu0 %v201
  %221 = vmatprep.subr.mxu0 0.0
  %222 = vmatpush1.msra.mxu0 0.0
  %223 = vmatprep.subr.mxu0 0.0
  %224 = vmatpush1.msra.mxu0 0.0
  %225 = vmatprep.subr.mxu0 0.0
  %226 = vmatpush1.msra.mxu0 0.0
  %227 = vmatprep.subr.mxu0 0.0
  %228 = vmatpush1.msra.mxu0 0.0
  %229 = vmatprep.subr.mxu0 0.0
  %230 = vmatpush1.msra.mxu0 0.0
  %231 = vmatprep.subr.mxu0 0.0
  %232 = vmatpush1.msra.mxu0 0.0
  %233 = vmatprep.subr.mxu0 0.0
  %234 = vmatpush1.msra.mxu0 0.0
  %235 = vmatprep.subr.mxu0 0.0
  %236 = vmatpush1.msra.mxu0 0.0
  %237 = vmatprep.subr.mxu0 0.0
  %238 = vmatpush1.msra.mxu0 0.0
  %239 = vmatprep.subr.mxu0 0.0
  %240 = vmatpush1.msra.mxu0 0.0
  %241 = vmatprep.subr.mxu0 0.0
  %242 = vmatpush1.msra.mxu0 0.0
  %243 = vmatprep.subr.mxu0 0.0
  %244 = vmatpush1.msra.mxu0 0.0
  %245 = vmatprep.subr.mxu0 0.0
  %246 = vmatpush1.msra.mxu0 0.0
  %247 = vmatprep.subr.mxu0 0.0
  %248 = vmatpush1.msra.mxu0 0.0
  %249 = vmatprep.subr.mxu0 0.0
  %250 = vmatpush1.msra.mxu0 0.0
  %251 = vmatprep.subr.mxu0 0.0
  %252 = vmatpush1.msra.mxu0 0.0
  %253 = vmatprep.subr.mxu0 0.0
  %254 = vmatpush1.msra.mxu0 0.0
  %255 = vmatprep.subr.mxu0 0.0
  %256 = vmatpush1.msra.mxu0 0.0
  %257 = vmatprep.subr.mxu0 0.0
  %258 = vmatpush1.msra.mxu0 0.0
  %259 = vmatprep.subr.mxu0 0.0
  %260 = vmatpush1.msra.mxu0 0.0
  %261 = vmatprep.subr.mxu0 0.0
  %262 = vmatpush1.msra.mxu0 0.0
  %263 = vmatprep.subr.mxu0 0.0
  %264 = vmatpush1.msra.mxu0 0.0
  %265 = vmatprep.subr.mxu0 0.0
  %266 = vmatpush1.msra.mxu0 0.0
  %267 = vmatprep.subr.mxu0 0.0
  %268 = vmatpush1.msra.mxu0 0.0
  %269 = vmatprep.subr.mxu0 0.0
  %270 = vmatpush1.msra.mxu0 0.0
  %271 = vmatprep.subr.mxu0 0.0
  %272 = vmatpush1.msra.mxu0 0.0
  %273 = vmatprep.subr.mxu0 0.0
  %274 = vmatpush1.msra.mxu0 0.0
  %275 = vmatprep.subr.mxu0 0.0
  %276 = vmatpush1.msra.mxu0 0.0
  %277 = vmatprep.mubr.f32.mxu0 0.0
  %278 = vmatmul.mubr.f32.gmra.mrb[0].mxu0 %v211
  %v279 = vpop.f32.mrb[0].mxu0
  %v280 = vadd.f32 %v207, %v279
  %v281 = vpop.f32.mrb[0].mxu0
  %282 = vdwg.mxu0
  %v283 = vmax.f32 %v280, 0.0
  %v284 = vld [vmem:[%s7] sm:$0x1]
  %s285 = sld [smem:[#allocation2]]
  %v287 = vlaneseq
  %v288 = vshrl.u32 %v287, 7
  %v289 = vsub.s32 0, %v288
  %v290 = vrot.slane %v284, %v289
  %v292 = vmul.f32 %v283, %v290
  %v293 = vsel %vm43, %v292, 0.0
  %294 = vadd.xlane.f32.xlu0 %v293
  %v295 = vpop.xlane.xlu0 %294
  %v296 = vstv %s285
  %v297 = vadd.f32 %v295, %v296
  %v298 = vsub.f32 0.0, %v297
  %v299 = vmul.f32 %v298, 1.442695
  %v300 = vpow.pop %v299
  %v301 = vadd.f32 %v300, 1.0
  %v302 = vrcp.pop %v301
  %vm303 = vcmask 7168
  %304 = vst.msk [vmem:[%s9] sm:$0xff] %vm303, %v302
  // Predicated region
  $region38: #{contrast_scores.1} parent=0 // pred_check
    _
  $region39: #{contrast_scores.1} parent=0 // pred_check_branch
    %306 = sbr.rel (0) target = $region41
  $region40: #{contrast_scores.1} parent=0 // pred_region
    _
  $region41: #{contrast_scores.1} parent=0 // pred_fallthru
    _
  // Predicated region
  $region42: #{contrast_scores.1} parent=0 // pred_check
    _
  $region43: #{contrast_scores.1} parent=0 // pred_check_branch
    %308 = sbr.rel (0) target = $region45
  $region44: #{contrast_scores.1} parent=0 // pred_region
    _
  $region45: #{contrast_scores.1} parent=0 // pred_fallthru
    _

</llo_original>
